<compile_context>
chip_gen: v6e
topology: v6e:2x2x1
jax: 0.10.0
libtpu: 0.0.40
codegen_flags: <defaults>
</compile_context>

<pallas_src>
import jax
import jax.numpy as jnp
import numpy as np
from jax.experimental import pallas as pl
from jax.experimental.pallas import tpu as pltpu


# -----------------------------------------------------------------------------
# Static model configuration (a small instantiation of the PyTorch CNN module).
#   conv layer conf entries: (out_channels, kernel, relu, batchnorm, maxpool)
#   fc conf: [flattened_in, hidden_0, ...]   (then a final Linear -> OUT_DIM)
# -----------------------------------------------------------------------------
B, C_IN, L_IN = 16, 4, 16
CONV_CONF = [
    (8, 3, True, False, True),     # Conv1d(4 -> 8, k=3)  + ReLU + MaxPool1d(2)
    (16, 3, True, False, True),    # Conv1d(8 -> 16, k=3) + ReLU + MaxPool1d(2)
]
FC_CONF = [32, 32]                 # flatten (16*2 = 32) -> Linear(32, 32) + ReLU
OUT_DIM = 2                        # -> Linear(32, 2)
NUM_BATCH_TILES = 1                # grid steps; use 2 on v7x (2 TensorCores)


def make_cnn_kernel(conv_meta, fc_relu, l_last):
    """conv_meta: [(relu, maxpool), ...]; fc_relu: [relu_flag per FC layer]
    (the first FC consumes the flattened conv output); l_last: spatial length
    after the conv stack."""
    n_params = 3 * len(conv_meta) + (2 * l_last + 1) + 2 * (len(fc_relu) - 1)

    def kernel(x_ref, *refs):
        assert len(refs) == n_params + 1
        out_ref = refs[-1]
        prefs = refs[:-1]
        pi = 0

        h = x_ref[0].astype(jnp.float32)                 # [C_in, TB*L_in]

        # ----------------- conv stack: one MXU matmul per layer --------------
        for relu, mp in conv_meta:
            w = prefs[pi][...]                           # [O, K*C]
            b = prefs[pi + 1][...]                       # [O, 1]
            sel = prefs[pi + 2][...]                     # [TB*L_in, TB*L_next]
            pi += 3

            c_in = h.shape[0]
            ksize = w.shape[1] // c_in

            # Stack the K shifted tap views along the contraction dim.  The
            # shift wraps across sample boundaries on the fused lane axis, but
            # those lanes are never selected by `sel`, so the bleed never
            # propagates.  (Static lane slice + concat; at 128-aligned lane
            # widths pltpu.roll would move this onto the XLU.)
            if ksize > 1:
                taps = [h] + [jnp.concatenate([h[:, t:], h[:, :t]], axis=-1)
                              for t in range(1, ksize)]
                x_stack = jnp.concatenate(taps, axis=0)  # [K*C, TB*L_in]
            else:
                x_stack = h

            y = jnp.dot(w, x_stack, preferred_element_type=jnp.float32) + b
            if relu:
                y = jnp.maximum(y, 0.0)
            if mp:
                # MaxPool1d(2): max of each lane with its right neighbour
                # (VPU); even/valid lanes are compacted by the selection
                # matmul below.  Pair partners never cross a sample boundary.
                y_nxt = jnp.concatenate([y[:, 1:], y[:, :1]], axis=-1)
                y = jnp.maximum(y, y_nxt)
            # Drop invalid lanes (+ pool compaction):  [O, TB*L_next].
            h = jnp.dot(y, sel, preferred_element_type=jnp.float32)

        # --------- flatten folded into the first FC layer --------------------
        # y1[o, b] = sum_{c,l} Wfc[o, c*L_last + l] * h[c, b*L_last + l]
        w_l = [prefs[pi + l][...] for l in range(l_last)]            # [H1, C_last]
        e_l = [prefs[pi + l_last + l][...] for l in range(l_last)]   # [TB*L_last, TB]
        b1 = prefs[pi + 2 * l_last][...]                             # [H1, 1]
        pi += 2 * l_last + 1

        y = b1
        for l in range(l_last):
            g = jnp.dot(h, e_l[l], preferred_element_type=jnp.float32)  # [C_last, TB]
            y = y + jnp.dot(w_l[l], g, preferred_element_type=jnp.float32)
        if fc_relu[0]:
            y = jnp.maximum(y, 0.0)

        # --------- remaining FC layers (activations stay [H, TB]) ------------
        for relu in fc_relu[1:]:
            w = prefs[pi][...]                           # [out, in]
            b = prefs[pi + 1][...]                       # [out, 1]
            pi += 2
            y = jnp.dot(w, y, preferred_element_type=jnp.float32) + b
            if relu:
                y = jnp.maximum(y, 0.0)

        out_ref[0] = y.astype(out_ref.dtype)             # [OUT_DIM, TB]

    return kernel


def cnn_forward_pallas(x, params, conv_conf, fc_conf, out_dim, num_batch_tiles=1):
    """Pallas CNN forward.  `params` use PyTorch layouts:
         conv: ("conv", w [O, C, K], b [O]),   fc: ("fc", w [out, in], b [out])."""
    batch, c_in, l_in = x.shape
    assert batch % num_batch_tiles == 0
    tb = batch // num_batch_tiles

    kparams = []
    conv_meta = []
    flops = 0
    chans, length = c_in, l_in
    it = iter(params)

    for out_ch, ksize, relu, bn, mp in conv_conf:
        if bn:
            # TODO(synk): eval-mode BatchNorm1d folds host-side into a
            # per-channel scale/shift of (w, b); training-mode BN needs
            # whole-batch statistics and is not implemented in-kernel.
            raise NotImplementedError("BatchNorm1d not supported in this kernel")
        kind, w, b = next(it)
        assert kind == "conv"
        # [O, C, K] -> tap-major [O, K*C]
        w_stack = jnp.transpose(w, (0, 2, 1)).reshape(out_ch, ksize * chans)
        l_valid = length - ksize + 1
        l_next = l_valid // 2 if mp else l_valid
        sel = np.zeros((tb * length, tb * l_next), np.float32)
        for bb in range(tb):
            for j in range(l_next):
                sel[bb * length + (2 * j if mp else j), bb * l_next + j] = 1.0
        kparams += [w_stack.astype(jnp.float32),
                    b.reshape(-1, 1).astype(jnp.float32),
                    jnp.asarray(sel)]
        conv_meta.append((relu, mp))
        flops += 2 * out_ch * ksize * chans * tb * length        # conv matmul
        flops += 2 * out_ch * (tb * length) * (tb * l_next)      # compaction
        chans, length = out_ch, l_next

    c_last, l_last = chans, length
    assert c_last * l_last == fc_conf[0], "fc_conf[0] must equal the flattened size"

    fc_sizes = list(fc_conf[1:]) + [out_dim]
    fc_relu = [True] * len(fc_conf[1:]) + [False]

    # First FC layer: split its weight per spatial position (flatten fusion).
    kind, w, b = next(it)
    h1 = fc_sizes[0]
    w3 = w.reshape(h1, c_last, l_last).astype(jnp.float32)
    for l in range(l_last):
        kparams.append(w3[:, :, l])                               # [H1, C_last]
    for l in range(l_last):
        e = np.zeros((tb * l_last, tb), np.float32)
        for bb in range(tb):
            e[bb * l_last + l, bb] = 1.0
        kparams.append(jnp.asarray(e))                            # [TB*L_last, TB]
    kparams.append(b.reshape(-1, 1).astype(jnp.float32))
    flops += l_last * (2 * c_last * (tb * l_last) * tb + 2 * h1 * c_last * tb)

    num_in = h1
    for size in fc_sizes[1:]:
        kind, w, b = next(it)
        kparams += [w.astype(jnp.float32), b.reshape(-1, 1).astype(jnp.float32)]
        flops += 2 * size * num_in * tb
        num_in = size

    flops *= num_batch_tiles

    # [B, C, L] -> [num_tiles, C, TB*L]  (lane-dense fused batch*length axis).
    x_fused = (x.astype(jnp.float32)
               .reshape(num_batch_tiles, tb, c_in, l_in)
               .transpose(0, 2, 1, 3)
               .reshape(num_batch_tiles, c_in, tb * l_in))

    in_specs = [pl.BlockSpec((1, c_in, tb * l_in), lambda i: (i, 0, 0))]
    for p in kparams:
        # Full-array blocks + constant index_maps: every weight / selector
        # stays VMEM-resident across grid steps.
        in_specs.append(pl.BlockSpec(p.shape, lambda i, nd=p.ndim: (0,) * nd))

    out_shape = jax.ShapeDtypeStruct((num_batch_tiles, out_dim, tb), jnp.float32)
    out_specs = pl.BlockSpec((1, out_dim, tb), lambda i: (i, 0, 0))

    bytes_accessed = int(x_fused.size * 4 + sum(int(p.size) * 4 for p in kparams)
                         + num_batch_tiles * out_dim * tb * 4)

    fwd = pl.pallas_call(
        make_cnn_kernel(conv_meta, fc_relu, l_last),
        out_shape=out_shape,
        grid=(num_batch_tiles,),
        in_specs=in_specs,
        out_specs=out_specs,
        compiler_params=pltpu.CompilerParams(
            # Batch tiles are independent; with num_batch_tiles=2 on v7x both
            # TensorCores get one tile.  (grid=(1,) on single-TC v5e/v6e.)
            dimension_semantics=("parallel",),
        ),
        cost_estimate=pl.CostEstimate(flops=int(flops), transcendentals=0,
                                      bytes_accessed=bytes_accessed),
    )
    out = fwd(x_fused, *kparams)                       # [nt, OUT_DIM, TB]
    return out.transpose(0, 2, 1).reshape(batch, out_dim)


def reference_forward(x, params, conv_conf, fc_conf, out_dim):
    """Pure-JAX re-implementation of the PyTorch module's forward()."""
    h = x
    it = iter(params)
    for (out_ch, ksize, relu, bn, mp) in conv_conf:
        _, w, b = next(it)
        h = jax.lax.conv_general_dilated(
            h, w, window_strides=(1,), padding="VALID",
            dimension_numbers=("NCH", "OIH", "NCH"))
        h = h + b[None, :, None]
        if relu:
            h = jnp.maximum(h, 0.0)
        if mp:
            pooled = h.shape[-1] // 2
            h = jnp.max(
                h[..., : 2 * pooled].reshape(h.shape[0], h.shape[1], pooled, 2),
                axis=-1)
    y = h.reshape(h.shape[0], -1)
    for _ in fc_conf[1:]:
        _, w, b = next(it)
        y = jnp.maximum(y @ w.T + b, 0.0)
    _, w, b = next(it)
    y = y @ w.T + b
    return y


def init_params(key, conv_conf, fc_conf, out_dim, c_in):
    params = []
    in_ch = c_in
    for (out_ch, ksize, _relu, _bn, _mp) in conv_conf:
        key, kw, kb = jax.random.split(key, 3)
        params.append(("conv",
                       0.3 * jax.random.normal(kw, (out_ch, in_ch, ksize), jnp.float32),
                       0.1 * jax.random.normal(kb, (out_ch,), jnp.float32)))
        in_ch = out_ch
    num_in = fc_conf[0]
    for layer_size in fc_conf[1:]:
        key, kw, kb = jax.random.split(key, 3)
        params.append(("fc",
                       0.3 * jax.random.normal(kw, (layer_size, num_in), jnp.float32),
                       0.1 * jax.random.normal(kb, (layer_size,), jnp.float32)))
        num_in = layer_size
    key, kw, kb = jax.random.split(key, 3)
    params.append(("fc",
                   0.3 * jax.random.normal(kw, (out_dim, num_in), jnp.float32),
                   0.1 * jax.random.normal(kb, (out_dim,), jnp.float32)))
    return params


if __name__ == "__main__":
    key = jax.random.PRNGKey(0)
    key, kx = jax.random.split(key)
    x = jax.random.normal(kx, (B, C_IN, L_IN), jnp.float32)
    params = init_params(key, CONV_CONF, FC_CONF, OUT_DIM, C_IN)

    out = jax.block_until_ready(
        cnn_forward_pallas(x, params, CONV_CONF, FC_CONF, OUT_DIM,
                           num_batch_tiles=NUM_BATCH_TILES))

    ref = jax.block_until_ready(
        reference_forward(x, params, CONV_CONF, FC_CONF, OUT_DIM))
    np.testing.assert_allclose(np.asarray(out), np.asarray(ref),
                               rtol=1e-3, atol=1e-3)

    print("KERNEL_OK")
</pallas_src>

<mosaic_0001>
module attributes {stable_mosaic.version = 11 : i64} {
  func.func @kernel(%arg0: i32, %arg1: memref<1x4x256xf32, #tpu.memory_space<vmem>>, %arg2: memref<8x12xf32, #tpu.memory_space<vmem>>, %arg3: memref<8x1xf32, #tpu.memory_space<vmem>>, %arg4: memref<256x112xf32, #tpu.memory_space<vmem>>, %arg5: memref<16x24xf32, #tpu.memory_space<vmem>>, %arg6: memref<16x1xf32, #tpu.memory_space<vmem>>, %arg7: memref<112x32xf32, #tpu.memory_space<vmem>>, %arg8: memref<32x16xf32, #tpu.memory_space<vmem>>, %arg9: memref<32x16xf32, #tpu.memory_space<vmem>>, %arg10: memref<32x16xf32, #tpu.memory_space<vmem>>, %arg11: memref<32x16xf32, #tpu.memory_space<vmem>>, %arg12: memref<32x1xf32, #tpu.memory_space<vmem>>, %arg13: memref<2x32xf32, #tpu.memory_space<vmem>>, %arg14: memref<2x1xf32, #tpu.memory_space<vmem>>, %arg15: memref<1x2x16xf32, #tpu.memory_space<vmem>>) attributes {dimension_semantics = [#tpu.dimension_semantics<parallel>], iteration_bounds = array<i64: 1>, scalar_prefetch = 0 : i64, scratch_operands = 0 : i64, tpu.core_type = #tpu.core_type<tc>, window_params = [{transform_indices = @transform_0, window_bounds = array<i64: 1, 4, 256>}, {pipeline_mode = #tpu.pipeline_mode<synchronous>, transform_indices = @transform_1, window_bounds = array<i64: 8, 12>}, {pipeline_mode = #tpu.pipeline_mode<synchronous>, transform_indices = @transform_2, window_bounds = array<i64: 8, 1>}, {pipeline_mode = #tpu.pipeline_mode<synchronous>, transform_indices = @transform_3, window_bounds = array<i64: 256, 112>}, {pipeline_mode = #tpu.pipeline_mode<synchronous>, transform_indices = @transform_4, window_bounds = array<i64: 16, 24>}, {pipeline_mode = #tpu.pipeline_mode<synchronous>, transform_indices = @transform_5, window_bounds = array<i64: 16, 1>}, {pipeline_mode = #tpu.pipeline_mode<synchronous>, transform_indices = @transform_6, window_bounds = array<i64: 112, 32>}, {pipeline_mode = #tpu.pipeline_mode<synchronous>, transform_indices = @transform_7, window_bounds = array<i64: 32, 16>}, {pipeline_mode = #tpu.pipeline_mode<synchronous>, transform_indices = @transform_8, window_bounds = array<i64: 32, 16>}, {pipeline_mode = #tpu.pipeline_mode<synchronous>, transform_indices = @transform_9, window_bounds = array<i64: 32, 16>}, {pipeline_mode = #tpu.pipeline_mode<synchronous>, transform_indices = @transform_10, window_bounds = array<i64: 32, 16>}, {pipeline_mode = #tpu.pipeline_mode<synchronous>, transform_indices = @transform_11, window_bounds = array<i64: 32, 1>}, {pipeline_mode = #tpu.pipeline_mode<synchronous>, transform_indices = @transform_12, window_bounds = array<i64: 2, 32>}, {pipeline_mode = #tpu.pipeline_mode<synchronous>, transform_indices = @transform_13, window_bounds = array<i64: 2, 1>}, {transform_indices = @transform_14, window_bounds = array<i64: 1, 2, 16>}]} {
    %c0 = arith.constant 0 : index
    %c0_0 = arith.constant 0 : index
    %c0_1 = arith.constant 0 : index
    %0 = vector.load %arg1[%c0, %c0_0, %c0_1] : memref<1x4x256xf32, #tpu.memory_space<vmem>>, vector<1x4x256xf32>
    %1 = vector.shape_cast %0 : vector<1x4x256xf32> to vector<4x256xf32>
    %c0_2 = arith.constant 0 : index
    %c0_3 = arith.constant 0 : index
    %2 = vector.load %arg2[%c0_2, %c0_3] : memref<8x12xf32, #tpu.memory_space<vmem>>, vector<8x12xf32>
    %c0_4 = arith.constant 0 : index
    %c0_5 = arith.constant 0 : index
    %3 = vector.load %arg3[%c0_4, %c0_5] : memref<8x1xf32, #tpu.memory_space<vmem>>, vector<8x1xf32>
    %c0_6 = arith.constant 0 : index
    %c0_7 = arith.constant 0 : index
    %4 = vector.load %arg4[%c0_6, %c0_7] : memref<256x112xf32, #tpu.memory_space<vmem>>, vector<256x112xf32>
    %5 = vector.extract_strided_slice %1 {offsets = [0, 1], sizes = [4, 255], strides = [1, 1]} : vector<4x256xf32> to vector<4x255xf32>
    %6 = vector.extract_strided_slice %1 {offsets = [0, 0], sizes = [4, 1], strides = [1, 1]} : vector<4x256xf32> to vector<4x1xf32>
    %7 = tpu.concatenate %5, %6 in 1 : vector<4x255xf32>, vector<4x1xf32> -> vector<4x256xf32>
    %8 = vector.extract_strided_slice %1 {offsets = [0, 2], sizes = [4, 254], strides = [1, 1]} : vector<4x256xf32> to vector<4x254xf32>
    %9 = vector.extract_strided_slice %1 {offsets = [0, 0], sizes = [4, 2], strides = [1, 1]} : vector<4x256xf32> to vector<4x2xf32>
    %10 = tpu.concatenate %8, %9 in 1 : vector<4x254xf32>, vector<4x2xf32> -> vector<4x256xf32>
    %11 = tpu.concatenate %1, %7, %10 in 0 : vector<4x256xf32>, vector<4x256xf32>, vector<4x256xf32> -> vector<12x256xf32>
    %cst = arith.constant dense<0.000000e+00> : vector<8x256xf32>
    %12 = tpu.matmul %2, %11, %cst {dimension_numbers = #tpu.dot_dimension_numbers<[1], [0], [0], [1], [0, 0, 1, 1], [], []>} : vector<8x12xf32>, vector<12x256xf32>, vector<8x256xf32> -> vector<8x256xf32>
    %13 = vector.broadcast %3 : vector<8x1xf32> to vector<8x256xf32>
    %14 = arith.addf %12, %13 : vector<8x256xf32>
    %cst_8 = arith.constant 0.000000e+00 : f32
    %15 = vector.broadcast %cst_8 : f32 to vector<8x256xf32>
    %16 = arith.maximumf %14, %15 : vector<8x256xf32>
    %17 = vector.extract_strided_slice %16 {offsets = [0, 1], sizes = [8, 255], strides = [1, 1]} : vector<8x256xf32> to vector<8x255xf32>
    %18 = vector.extract_strided_slice %16 {offsets = [0, 0], sizes = [8, 1], strides = [1, 1]} : vector<8x256xf32> to vector<8x1xf32>
    %19 = tpu.concatenate %17, %18 in 1 : vector<8x255xf32>, vector<8x1xf32> -> vector<8x256xf32>
    %20 = arith.maximumf %16, %19 : vector<8x256xf32>
    %cst_9 = arith.constant dense<0.000000e+00> : vector<8x112xf32>
    %21 = tpu.matmul %20, %4, %cst_9 {dimension_numbers = #tpu.dot_dimension_numbers<[1], [0], [0], [1], [0, 0, 1, 1], [], []>} : vector<8x256xf32>, vector<256x112xf32>, vector<8x112xf32> -> vector<8x112xf32>
    %c0_10 = arith.constant 0 : index
    %c0_11 = arith.constant 0 : index
    %22 = vector.load %arg5[%c0_10, %c0_11] : memref<16x24xf32, #tpu.memory_space<vmem>>, vector<16x24xf32>
    %c0_12 = arith.constant 0 : index
    %c0_13 = arith.constant 0 : index
    %23 = vector.load %arg6[%c0_12, %c0_13] : memref<16x1xf32, #tpu.memory_space<vmem>>, vector<16x1xf32>
    %c0_14 = arith.constant 0 : index
    %c0_15 = arith.constant 0 : index
    %24 = vector.load %arg7[%c0_14, %c0_15] : memref<112x32xf32, #tpu.memory_space<vmem>>, vector<112x32xf32>
    %25 = vector.extract_strided_slice %21 {offsets = [0, 1], sizes = [8, 111], strides = [1, 1]} : vector<8x112xf32> to vector<8x111xf32>
    %26 = vector.extract_strided_slice %21 {offsets = [0, 0], sizes = [8, 1], strides = [1, 1]} : vector<8x112xf32> to vector<8x1xf32>
    %27 = tpu.concatenate %25, %26 in 1 : vector<8x111xf32>, vector<8x1xf32> -> vector<8x112xf32>
    %28 = vector.extract_strided_slice %21 {offsets = [0, 2], sizes = [8, 110], strides = [1, 1]} : vector<8x112xf32> to vector<8x110xf32>
    %29 = vector.extract_strided_slice %21 {offsets = [0, 0], sizes = [8, 2], strides = [1, 1]} : vector<8x112xf32> to vector<8x2xf32>
    %30 = tpu.concatenate %28, %29 in 1 : vector<8x110xf32>, vector<8x2xf32> -> vector<8x112xf32>
    %31 = tpu.concatenate %21, %27, %30 in 0 : vector<8x112xf32>, vector<8x112xf32>, vector<8x112xf32> -> vector<24x112xf32>
    %cst_16 = arith.constant dense<0.000000e+00> : vector<16x112xf32>
    %32 = tpu.matmul %22, %31, %cst_16 {dimension_numbers = #tpu.dot_dimension_numbers<[1], [0], [0], [1], [0, 0, 1, 1], [], []>} : vector<16x24xf32>, vector<24x112xf32>, vector<16x112xf32> -> vector<16x112xf32>
    %33 = vector.broadcast %23 : vector<16x1xf32> to vector<16x112xf32>
    %34 = arith.addf %32, %33 : vector<16x112xf32>
    %cst_17 = arith.constant 0.000000e+00 : f32
    %35 = vector.broadcast %cst_17 : f32 to vector<16x112xf32>
    %36 = arith.maximumf %34, %35 : vector<16x112xf32>
    %37 = vector.extract_strided_slice %36 {offsets = [0, 1], sizes = [16, 111], strides = [1, 1]} : vector<16x112xf32> to vector<16x111xf32>
    %38 = vector.extract_strided_slice %36 {offsets = [0, 0], sizes = [16, 1], strides = [1, 1]} : vector<16x112xf32> to vector<16x1xf32>
    %39 = tpu.concatenate %37, %38 in 1 : vector<16x111xf32>, vector<16x1xf32> -> vector<16x112xf32>
    %40 = arith.maximumf %36, %39 : vector<16x112xf32>
    %cst_18 = arith.constant dense<0.000000e+00> : vector<16x32xf32>
    %41 = tpu.matmul %40, %24, %cst_18 {dimension_numbers = #tpu.dot_dimension_numbers<[1], [0], [0], [1], [0, 0, 1, 1], [], []>} : vector<16x112xf32>, vector<112x32xf32>, vector<16x32xf32> -> vector<16x32xf32>
    %c0_19 = arith.constant 0 : index
    %c0_20 = arith.constant 0 : index
    %42 = vector.load %arg8[%c0_19, %c0_20] : memref<32x16xf32, #tpu.memory_space<vmem>>, vector<32x16xf32>
    %c0_21 = arith.constant 0 : index
    %c0_22 = arith.constant 0 : index
    %43 = vector.load %arg9[%c0_21, %c0_22] : memref<32x16xf32, #tpu.memory_space<vmem>>, vector<32x16xf32>
    %c0_23 = arith.constant 0 : index
    %c0_24 = arith.constant 0 : index
    %44 = vector.load %arg10[%c0_23, %c0_24] : memref<32x16xf32, #tpu.memory_space<vmem>>, vector<32x16xf32>
    %c0_25 = arith.constant 0 : index
    %c0_26 = arith.constant 0 : index
    %45 = vector.load %arg11[%c0_25, %c0_26] : memref<32x16xf32, #tpu.memory_space<vmem>>, vector<32x16xf32>
    %c0_27 = arith.constant 0 : index
    %c0_28 = arith.constant 0 : index
    %46 = vector.load %arg12[%c0_27, %c0_28] : memref<32x1xf32, #tpu.memory_space<vmem>>, vector<32x1xf32>
    %cst_29 = arith.constant dense<0.000000e+00> : vector<16x16xf32>
    %47 = tpu.matmul %41, %44, %cst_29 {dimension_numbers = #tpu.dot_dimension_numbers<[1], [0], [0], [1], [0, 0, 1, 1], [], []>} : vector<16x32xf32>, vector<32x16xf32>, vector<16x16xf32> -> vector<16x16xf32>
    %cst_30 = arith.constant dense<0.000000e+00> : vector<32x16xf32>
    %48 = tpu.matmul %42, %47, %cst_30 {dimension_numbers = #tpu.dot_dimension_numbers<[1], [0], [0], [1], [0, 0, 1, 1], [], []>} : vector<32x16xf32>, vector<16x16xf32>, vector<32x16xf32> -> vector<32x16xf32>
    %49 = vector.broadcast %46 : vector<32x1xf32> to vector<32x16xf32>
    %50 = arith.addf %49, %48 : vector<32x16xf32>
    %cst_31 = arith.constant dense<0.000000e+00> : vector<16x16xf32>
    %51 = tpu.matmul %41, %45, %cst_31 {dimension_numbers = #tpu.dot_dimension_numbers<[1], [0], [0], [1], [0, 0, 1, 1], [], []>} : vector<16x32xf32>, vector<32x16xf32>, vector<16x16xf32> -> vector<16x16xf32>
    %cst_32 = arith.constant dense<0.000000e+00> : vector<32x16xf32>
    %52 = tpu.matmul %43, %51, %cst_32 {dimension_numbers = #tpu.dot_dimension_numbers<[1], [0], [0], [1], [0, 0, 1, 1], [], []>} : vector<32x16xf32>, vector<16x16xf32>, vector<32x16xf32> -> vector<32x16xf32>
    %53 = arith.addf %50, %52 : vector<32x16xf32>
    %cst_33 = arith.constant 0.000000e+00 : f32
    %54 = vector.broadcast %cst_33 : f32 to vector<32x16xf32>
    %55 = arith.maximumf %53, %54 : vector<32x16xf32>
    %c0_34 = arith.constant 0 : index
    %c0_35 = arith.constant 0 : index
    %56 = vector.load %arg13[%c0_34, %c0_35] : memref<2x32xf32, #tpu.memory_space<vmem>>, vector<2x32xf32>
    %c0_36 = arith.constant 0 : index
    %c0_37 = arith.constant 0 : index
    %57 = vector.load %arg14[%c0_36, %c0_37] : memref<2x1xf32, #tpu.memory_space<vmem>>, vector<2x1xf32>
    %cst_38 = arith.constant dense<0.000000e+00> : vector<2x16xf32>
    %58 = tpu.matmul %56, %55, %cst_38 {dimension_numbers = #tpu.dot_dimension_numbers<[1], [0], [0], [1], [0, 0, 1, 1], [], []>} : vector<2x32xf32>, vector<32x16xf32>, vector<2x16xf32> -> vector<2x16xf32>
    %59 = vector.broadcast %57 : vector<2x1xf32> to vector<2x16xf32>
    %60 = arith.addf %58, %59 : vector<2x16xf32>
    %c0_39 = arith.constant 0 : index
    %c0_40 = arith.constant 0 : index
    %c0_41 = arith.constant 0 : index
    %61 = vector.load %arg15[%c0_39, %c0_40, %c0_41] : memref<1x2x16xf32, #tpu.memory_space<vmem>>, vector<1x2x16xf32>
    %62 = vector.shape_cast %61 : vector<1x2x16xf32> to vector<2x16xf32>
    %63 = vector.shape_cast %60 : vector<2x16xf32> to vector<1x2x16xf32>
    tpu.vector_store %arg15[%c0_39, %c0_40, %c0_41], %63 {strides = array<i32>} : memref<1x2x16xf32, #tpu.memory_space<vmem>>, vector<1x2x16xf32>,
    return
  }
  func.func @transform_0(%arg0: i32) -> (i32, i32, i32) {
    %c0_i32 = arith.constant 0 : i32
    %c0_i32_0 = arith.constant 0 : i32
    %c0_i32_1 = arith.constant 0 : i32
    return %arg0, %c0_i32, %c0_i32_0 : i32, i32, i32
  }
  func.func @transform_1(%arg0: i32) -> (i32, i32) {
    %c0_i32 = arith.constant 0 : i32
    %c0_i32_0 = arith.constant 0 : i32
    %c0_i32_1 = arith.constant 0 : i32
    return %c0_i32, %c0_i32_0 : i32, i32
  }
  func.func @transform_2(%arg0: i32) -> (i32, i32) {
    %c0_i32 = arith.constant 0 : i32
    %c0_i32_0 = arith.constant 0 : i32
    %c0_i32_1 = arith.constant 0 : i32
    return %c0_i32, %c0_i32_0 : i32, i32
  }
  func.func @transform_3(%arg0: i32) -> (i32, i32) {
    %c0_i32 = arith.constant 0 : i32
    %c0_i32_0 = arith.constant 0 : i32
    %c0_i32_1 = arith.constant 0 : i32
    return %c0_i32, %c0_i32_0 : i32, i32
  }
  func.func @transform_4(%arg0: i32) -> (i32, i32) {
    %c0_i32 = arith.constant 0 : i32
    %c0_i32_0 = arith.constant 0 : i32
    %c0_i32_1 = arith.constant 0 : i32
    return %c0_i32, %c0_i32_0 : i32, i32
  }
  func.func @transform_5(%arg0: i32) -> (i32, i32) {
    %c0_i32 = arith.constant 0 : i32
    %c0_i32_0 = arith.constant 0 : i32
    %c0_i32_1 = arith.constant 0 : i32
    return %c0_i32, %c0_i32_0 : i32, i32
  }
  func.func @transform_6(%arg0: i32) -> (i32, i32) {
    %c0_i32 = arith.constant 0 : i32
    %c0_i32_0 = arith.constant 0 : i32
    %c0_i32_1 = arith.constant 0 : i32
    return %c0_i32, %c0_i32_0 : i32, i32
  }
  func.func @transform_7(%arg0: i32) -> (i32, i32) {
    %c0_i32 = arith.constant 0 : i32
    %c0_i32_0 = arith.constant 0 : i32
    %c0_i32_1 = arith.constant 0 : i32
    return %c0_i32, %c0_i32_0 : i32, i32
  }
  func.func @transform_8(%arg0: i32) -> (i32, i32) {
    %c0_i32 = arith.constant 0 : i32
    %c0_i32_0 = arith.constant 0 : i32
    %c0_i32_1 = arith.constant 0 : i32
    return %c0_i32, %c0_i32_0 : i32, i32
  }
  func.func @transform_9(%arg0: i32) -> (i32, i32) {
    %c0_i32 = arith.constant 0 : i32
    %c0_i32_0 = arith.constant 0 : i32
    %c0_i32_1 = arith.constant 0 : i32
    return %c0_i32, %c0_i32_0 : i32, i32
  }
  func.func @transform_10(%arg0: i32) -> (i32, i32) {
    %c0_i32 = arith.constant 0 : i32
    %c0_i32_0 = arith.constant 0 : i32
    %c0_i32_1 = arith.constant 0 : i32
    return %c0_i32, %c0_i32_0 : i32, i32
  }
  func.func @transform_11(%arg0: i32) -> (i32, i32) {
    %c0_i32 = arith.constant 0 : i32
    %c0_i32_0 = arith.constant 0 : i32
    %c0_i32_1 = arith.constant 0 : i32
    return %c0_i32, %c0_i32_0 : i32, i32
  }
  func.func @transform_12(%arg0: i32) -> (i32, i32) {
    %c0_i32 = arith.constant 0 : i32
    %c0_i32_0 = arith.constant 0 : i32
    %c0_i32_1 = arith.constant 0 : i32
    return %c0_i32, %c0_i32_0 : i32, i32
  }
  func.func @transform_13(%arg0: i32) -> (i32, i32) {
    %c0_i32 = arith.constant 0 : i32
    %c0_i32_0 = arith.constant 0 : i32
    %c0_i32_1 = arith.constant 0 : i32
    return %c0_i32, %c0_i32_0 : i32, i32
  }
  func.func @transform_14(%arg0: i32) -> (i32, i32, i32) {
    %c0_i32 = arith.constant 0 : i32
    %c0_i32_0 = arith.constant 0 : i32
    %c0_i32_1 = arith.constant 0 : i32
    return %arg0, %c0_i32, %c0_i32_0 : i32, i32, i32
  }
}

</mosaic_0001>

<llo_original>
// kernel: tpu_custom_call.1
$region0: #{tpu_custom_call.1}
  #allocation0 [shape = 'u32[]', space=smem, size = 0x4, offset = 0x4, fixed_abs, tag = 'smem constant byte address 0x4 - core index']
  #allocation1 [shape = 'u32[144,128]{1,0:T(1,128)}', space=vmem, size = 0x12000, scoped, tag = 'internal scratch']
  %s0 = inlined_call_operand.vmem [shape: f32[1,4,256], index: 0, kind: input, shape index: {}]
  %s1 = inlined_call_operand.vmem [shape: f32[8,12], index: 1, kind: input, shape index: {}]
  %s2 = inlined_call_operand.vmem [shape: f32[8,1], index: 2, kind: input, shape index: {}]
  %s3 = inlined_call_operand.vmem [shape: f32[256,112], index: 3, kind: input, shape index: {}]
  %s4 = inlined_call_operand.vmem [shape: f32[16,24], index: 4, kind: input, shape index: {}]
  %s5 = inlined_call_operand.vmem [shape: f32[16,1], index: 5, kind: input, shape index: {}]
  %s6 = inlined_call_operand.vmem [shape: f32[112,32], index: 6, kind: input, shape index: {}]
  %s7 = inlined_call_operand.vmem [shape: f32[32,16], index: 7, kind: input, shape index: {}]
  %s8 = inlined_call_operand.vmem [shape: f32[32,16], index: 8, kind: input, shape index: {}]
  %s9 = inlined_call_operand.vmem [shape: f32[32,16], index: 9, kind: input, shape index: {}]
  %s10 = inlined_call_operand.vmem [shape: f32[32,16], index: 10, kind: input, shape index: {}]
  %s11 = inlined_call_operand.vmem [shape: f32[32,1], index: 11, kind: input, shape index: {}]
  %s12 = inlined_call_operand.vmem [shape: f32[2,32], index: 12, kind: input, shape index: {}]
  %s13 = inlined_call_operand.vmem [shape: f32[2,1], index: 13, kind: input, shape index: {}]
  %s14 = inlined_call_operand.hbm [shape: f32[1,2,16], index: 14, kind: output, shape index: {}]
  %s15 = sld [smem:[#allocation0]]
  $region66: #{tpu_custom_call.1} parent=0
    _
  %s17 = ssub.s32 1, %s15
  %s18 = scalar_select 0, %s17, %s15
  $region1: #{tpu_custom_call.1} parent=0
    #allocation2 [shape = 'u8[1024]{0}', space=vmem, size = 0x400, scoped, tag = 'output window, operand 0, single buffered']
    #allocation3 [shape = 's32[1]{0}', space=sflag, size = 0x4, scoped, tag = 'scoped memory for tpu_custom_call.1']
    %19 = vsyncpa [#allocation3], 0
    // Predicated region
    $region2: #{tpu_custom_call.1} parent=1 // pred_check
      _
    $region3: #{tpu_custom_call.1} parent=1 // pred_check_branch
      %21 = sbr.rel (0) target = $region5
    $region4: #{tpu_custom_call.1} parent=1 // pred_region
      _
    $region5: #{tpu_custom_call.1} parent=1 // pred_fallthru
      _
    // Predicated region
    $region6: #{tpu_custom_call.1} parent=1 // pred_check
      _
    $region7: #{tpu_custom_call.1} parent=1 // pred_check_branch
      %23 = sbr.rel (0) target = $region9
    $region8: #{tpu_custom_call.1} parent=1 // pred_region
      _
    $region9: #{tpu_custom_call.1} parent=1 // pred_fallthru
      _
    // Predicated region
    $region10: #{tpu_custom_call.1} parent=1 // pred_check
      _
    $region11: #{tpu_custom_call.1} parent=1 // pred_check_branch
      %25 = sbr.rel (0) target = $region13
    $region12: #{tpu_custom_call.1} parent=1 // pred_region
      _
    $region13: #{tpu_custom_call.1} parent=1 // pred_fallthru
      _
    // Predicated region
    $region14: #{tpu_custom_call.1} parent=1 // pred_check
      _
    $region15: #{tpu_custom_call.1} parent=1 // pred_check_branch
      %27 = sbr.rel (0) target = $region17
    $region16: #{tpu_custom_call.1} parent=1 // pred_region
      _
    $region17: #{tpu_custom_call.1} parent=1 // pred_fallthru
      _
    // Predicated region
    $region18: #{tpu_custom_call.1} parent=1 // pred_check
      _
    $region19: #{tpu_custom_call.1} parent=1 // pred_check_branch
      %29 = sbr.rel (0) target = $region21
    $region20: #{tpu_custom_call.1} parent=1 // pred_region
      _
    $region21: #{tpu_custom_call.1} parent=1 // pred_fallthru
      _
    // Predicated region
    $region22: #{tpu_custom_call.1} parent=1 // pred_check
      _
    $region23: #{tpu_custom_call.1} parent=1 // pred_check_branch
      %31 = sbr.rel (0) target = $region25
    $region24: #{tpu_custom_call.1} parent=1 // pred_region
      _
    $region25: #{tpu_custom_call.1} parent=1 // pred_fallthru
      _
    // Predicated region
    $region26: #{tpu_custom_call.1} parent=1 // pred_check
      _
    $region27: #{tpu_custom_call.1} parent=1 // pred_check_branch
      %33 = sbr.rel (0) target = $region29
    $region28: #{tpu_custom_call.1} parent=1 // pred_region
      _
    $region29: #{tpu_custom_call.1} parent=1 // pred_fallthru
      _
    // Predicated region
    $region30: #{tpu_custom_call.1} parent=1 // pred_check
      _
    $region31: #{tpu_custom_call.1} parent=1 // pred_check_branch
      %35 = sbr.rel (0) target = $region33
    $region32: #{tpu_custom_call.1} parent=1 // pred_region
      _
    $region33: #{tpu_custom_call.1} parent=1 // pred_fallthru
      _
    // Predicated region
    $region34: #{tpu_custom_call.1} parent=1 // pred_check
      _
    $region35: #{tpu_custom_call.1} parent=1 // pred_check_branch
      %37 = sbr.rel (0) target = $region37
    $region36: #{tpu_custom_call.1} parent=1 // pred_region
      _
    $region37: #{tpu_custom_call.1} parent=1 // pred_fallthru
      _
    // Predicated region
    $region38: #{tpu_custom_call.1} parent=1 // pred_check
      _
    $region39: #{tpu_custom_call.1} parent=1 // pred_check_branch
      %39 = sbr.rel (0) target = $region41
    $region40: #{tpu_custom_call.1} parent=1 // pred_region
      _
    $region41: #{tpu_custom_call.1} parent=1 // pred_fallthru
      _
    // Predicated region
    $region42: #{tpu_custom_call.1} parent=1 // pred_check
      _
    $region43: #{tpu_custom_call.1} parent=1 // pred_check_branch
      %41 = sbr.rel (0) target = $region45
    $region44: #{tpu_custom_call.1} parent=1 // pred_region
      _
    $region45: #{tpu_custom_call.1} parent=1 // pred_fallthru
      _
    // Predicated region
    $region46: #{tpu_custom_call.1} parent=1 // pred_check
      _
    $region47: #{tpu_custom_call.1} parent=1 // pred_check_branch
      %43 = sbr.rel (0) target = $region49
    $region48: #{tpu_custom_call.1} parent=1 // pred_region
      _
    $region49: #{tpu_custom_call.1} parent=1 // pred_fallthru
      _
    // Predicated region
    $region50: #{tpu_custom_call.1} parent=1 // pred_check
      _
    $region51: #{tpu_custom_call.1} parent=1 // pred_check_branch
      %45 = sbr.rel (0) target = $region53
    $region52: #{tpu_custom_call.1} parent=1 // pred_region
      _
    $region53: #{tpu_custom_call.1} parent=1 // pred_fallthru
      _
    // Predicated region
    $region54: #{tpu_custom_call.1} parent=1 // pred_check
      _
    $region55: #{tpu_custom_call.1} parent=1 // pred_check_branch
      %47 = sbr.rel (0) target = $region57
    $region56: #{tpu_custom_call.1} parent=1 // pred_region
      _
    $region57: #{tpu_custom_call.1} parent=1 // pred_fallthru
      _
    %v48 = vld [vmem:[%s0] sm:$0xff]
    %v49 = vld [vmem:[%s1] sm:$0xff]
    %v50 = vld [vmem:[%s2] sm:$0xff]
    %v51 = vld [vmem:[%s3] sm:$0xff]
    %v52 = vld [vmem:[%s3 + $0x8] sm:$0xff]
    %v53 = vld [vmem:[%s3 + $0x10] sm:$0xff]
    %v54 = vld [vmem:[%s3 + $0x18] sm:$0xff]
    %v55 = vld [vmem:[%s3 + $0x20] sm:$0xff]
    %v56 = vld [vmem:[%s3 + $0x28] sm:$0xff]
    %v57 = vld [vmem:[%s3 + $0x30] sm:$0xff]
    %v58 = vld [vmem:[%s3 + $0x38] sm:$0xff]
    %v59 = vld [vmem:[%s3 + $0x40] sm:$0xff]
    %v60 = vld [vmem:[%s3 + $0x48] sm:$0xff]
    %v61 = vld [vmem:[%s3 + $0x50] sm:$0xff]
    %v62 = vld [vmem:[%s3 + $0x58] sm:$0xff]
    %v63 = vld [vmem:[%s3 + $0x60] sm:$0xff]
    %v64 = vld [vmem:[%s3 + $0x68] sm:$0xff]
    %v65 = vld [vmem:[%s3 + $0x70] sm:$0xff]
    %v66 = vld [vmem:[%s3 + $0x78] sm:$0xff]
    %v67 = vld [vmem:[%s3 + $0x80] sm:$0xff]
    %v68 = vld [vmem:[%s3 + $0x88] sm:$0xff]
    %v69 = vld [vmem:[%s3 + $0x90] sm:$0xff]
    %v70 = vld [vmem:[%s3 + $0x98] sm:$0xff]
    %v71 = vld [vmem:[%s3 + $0xa0] sm:$0xff]
    %v72 = vld [vmem:[%s3 + $0xa8] sm:$0xff]
    %v73 = vld [vmem:[%s3 + $0xb0] sm:$0xff]
    %v74 = vld [vmem:[%s3 + $0xb8] sm:$0xff]
    %v75 = vld [vmem:[%s3 + $0xc0] sm:$0xff]
    %v76 = vld [vmem:[%s3 + $0xc8] sm:$0xff]
    %v77 = vld [vmem:[%s3 + $0xd0] sm:$0xff]
    %v78 = vld [vmem:[%s3 + $0xd8] sm:$0xff]
    %v79 = vld [vmem:[%s3 + $0xe0] sm:$0xff]
    %v80 = vld [vmem:[%s3 + $0xe8] sm:$0xff]
    %v81 = vld [vmem:[%s3 + $0xf0] sm:$0xff]
    %v82 = vld [vmem:[%s3 + $0xf8] sm:$0xff]
    %v84 = vcombine.high %v48, %v48
    %85 = vrot.lane.b32.xlu0 %v48, 127
    %v86 = vpop.permute.xlu0 %85
    %87 = vrot.lane.b32.xlu0 %v84, 127
    %v88 = vpop.permute.xlu0 %87
    %vm89 = vcmask 1039360
    %v90 = vsel %vm89, %v86, %v88
    %v93 = vsel %vm89, %v88, %v86
    %94 = vrot.lane.b32.xlu0 %v48, 126
    %v95 = vpop.permute.xlu0 %94
    %96 = vrot.lane.b32.xlu0 %v84, 126
    %v97 = vpop.permute.xlu0 %96
    %vm98 = vcmask 1031168
    %v99 = vsel %vm98, %v95, %v97
    %v102 = vsel %vm98, %v97, %v95
    %v105 = vrot.slane %v90, 4
    %v106 = vrot.slane %v93, 4
    %vm109 = vcmask 1043456
    %v110 = vsel %vm109, %v48, %v105
    %v111 = vsel %vm109, %v84, %v106
    %113 = vset.pattern.permute.xlu0 0
    %114 = vperm.xlu0 %113, %v50
    %v115 = vpop.permute.xlu0 %114
    %vm117 = vcmask 97280
    %v119 = vsel %vm117, %v49, 0
    %v121 = vsel %vm109, %v99, 0
    %v124 = vsel %vm109, %v102, 0
    %126 = vmatprep.subr.mxu0 0.0
    %127 = vmatpush1.msra.mxu0 0.0
    %128 = vmatprep.subr.mxu0 0.0
    %129 = vmatpush1.msra.mxu0 0.0
    %130 = vmatprep.subr.mxu0 0.0
    %131 = vmatpush1.msra.mxu0 0.0
    %132 = vmatprep.subr.mxu0 0.0
    %133 = vmatpush1.msra.mxu0 0.0
    %134 = vmatprep.subr.mxu0 0.0
    %135 = vmatpush1.msra.mxu0 0.0
    %136 = vmatprep.subr.mxu0 0.0
    %137 = vmatpush1.msra.mxu0 0.0
    %138 = vmatprep.subr.mxu0 0.0
    %139 = vmatpush1.msra.mxu0 0.0
    %140 = vmatprep.subr.mxu0 0.0
    %141 = vmatpush1.msra.mxu0 0.0
    %142 = vmatprep.subr.mxu0 0.0
    %143 = vmatpush1.msra.mxu0 0.0
    %144 = vmatprep.subr.mxu0 0.0
    %145 = vmatpush1.msra.mxu0 0.0
    %146 = vmatprep.subr.mxu0 0.0
    %147 = vmatpush1.msra.mxu0 0.0
    %148 = vmatprep.subr.mxu0 0.0
    %149 = vmatpush1.msra.mxu0 0.0
    %150 = vmatprep.subr.mxu0 0.0
    %151 = vmatpush1.msra.mxu0 0.0
    %152 = vmatprep.subr.mxu0 0.0
    %153 = vmatpush1.msra.mxu0 0.0
    %154 = vmatprep.subr.mxu0 %v124
    %155 = vmatpush1.msra.mxu0 %v121
    %156 = vmatprep.subr.mxu0 %v111
    %157 = vmatpush1.msra.mxu0 %v110
    %158 = vmatprep.subr.mxu0 0.0
    %159 = vmatpush2.msra.mxu0 0.0
    %160 = vmatprep.subr.mxu0 0.0
    %161 = vmatpush2.msra.mxu0 0.0
    %162 = vmatprep.subr.mxu0 0.0
    %163 = vmatpush2.msra.mxu0 0.0
    %164 = vmatprep.subr.mxu0 0.0
    %165 = vmatpush2.msra.mxu0 0.0
    %166 = vmatprep.subr.mxu0 0.0
    %167 = vmatpush2.msra.mxu0 0.0
    %168 = vmatprep.subr.mxu0 0.0
    %169 = vmatpush2.msra.mxu0 0.0
    %170 = vmatprep.subr.mxu0 0.0
    %171 = vmatpush2.msra.mxu0 0.0
    %172 = vmatprep.subr.mxu0 0.0
    %173 = vmatpush2.msra.mxu0 0.0
    %174 = vmatprep.subr.mxu0 0.0
    %175 = vmatpush2.msra.mxu0 0.0
    %176 = vmatprep.subr.mxu0 0.0
    %177 = vmatpush2.msra.mxu0 0.0
    %178 = vmatprep.subr.mxu0 0.0
    %179 = vmatpush2.msra.mxu0 0.0
    %180 = vmatprep.subr.mxu0 0.0
    %181 = vmatpush2.msra.mxu0 0.0
    %182 = vmatprep.subr.mxu0 0.0
    %183 = vmatpush2.msra.mxu0 0.0
    %184 = vmatprep.subr.mxu0 0.0
    %185 = vmatpush2.msra.mxu0 0.0
    %186 = vmatprep.subr.mxu0 0.0
    %187 = vmatpush2.msra.mxu0 0.0
    %188 = vmatprep.subr.mxu0 0.0
    %189 = vmatpush2.msra.mxu0 0.0
    %190 = vmatprep.mubr.f32.mxu0 0.0
    %191 = vmatmul.mubr.f32.gmra.mxu0 %v119
    %v192 = vpop.f32.mrf.mxu0
    %v193 = vadd.f32 %v115, %v192
    %v194 = vpop.f32.mrf.mxu0
    %v195 = vadd.f32 %v115, %v194
    %196 = vdwg.mxu0
    %v197 = vmax.f32 %v193, 0.0
    %v198 = vmax.f32 %v195, 0.0
    %201 = vrot.lane.b32.xlu0 %v197, 127
    %v202 = vpop.permute.xlu0 %201
    %203 = vrot.lane.b32.xlu0 %v198, 127
    %v204 = vpop.permute.xlu0 %203
    %v205 = vsel %vm89, %v202, %v204
    %v209 = vsel %vm89, %v204, %v202
    %v210 = vmax.f32 %v197, %v205
    %v211 = vmax.f32 %v198, %v209
    %212 = vmatprep.subr.mxu0 0.0
    %213 = vmatpush1.msra.mxu0 %v66
    %214 = vmatprep.subr.mxu0 0.0
    %215 = vmatpush1.msra.mxu0 %v65
    %216 = vmatprep.subr.mxu0 0.0
    %217 = vmatpush1.msra.mxu0 %v64
    %218 = vmatprep.subr.mxu0 0.0
    %219 = vmatpush1.msra.mxu0 %v63
    %220 = vmatprep.subr.mxu0 0.0
    %221 = vmatpush1.msra.mxu0 %v62
    %222 = vmatprep.subr.mxu0 0.0
    %223 = vmatpush1.msra.mxu0 %v61
    %224 = vmatprep.subr.mxu0 0.0
    %225 = vmatpush1.msra.mxu0 %v60
    %226 = vmatprep.subr.mxu0 0.0
    %227 = vmatpush1.msra.mxu0 %v59
    %228 = vmatprep.subr.mxu0 0.0
    %229 = vmatpush1.msra.mxu0 %v58
    %230 = vmatprep.subr.mxu0 0.0
    %231 = vmatpush1.msra.mxu0 %v57
    %232 = vmatprep.subr.mxu0 0.0
    %233 = vmatpush1.msra.mxu0 %v56
    %234 = vmatprep.subr.mxu0 0.0
    %235 = vmatpush1.msra.mxu0 %v55
    %236 = vmatprep.subr.mxu0 0.0
    %237 = vmatpush1.msra.mxu0 %v54
    %238 = vmatprep.subr.mxu0 0.0
    %239 = vmatpush1.msra.mxu0 %v53
    %240 = vmatprep.subr.mxu0 0.0
    %241 = vmatpush1.msra.mxu0 %v52
    %242 = vmatprep.subr.mxu0 0.0
    %243 = vmatpush1.msra.mxu0 %v51
    %244 = vmatprep.subr.mxu0 0.0
    %245 = vmatpush2.msra.mxu0 %v82
    %246 = vmatprep.subr.mxu0 0.0
    %247 = vmatpush2.msra.mxu0 %v81
    %248 = vmatprep.subr.mxu0 0.0
    %249 = vmatpush2.msra.mxu0 %v80
    %250 = vmatprep.subr.mxu0 0.0
    %251 = vmatpush2.msra.mxu0 %v79
    %252 = vmatprep.subr.mxu0 0.0
    %253 = vmatpush2.msra.mxu0 %v78
    %254 = vmatprep.subr.mxu0 0.0
    %255 = vmatpush2.msra.mxu0 %v77
    %256 = vmatprep.subr.mxu0 0.0
    %257 = vmatpush2.msra.mxu0 %v76
    %258 = vmatprep.subr.mxu0 0.0
    %259 = vmatpush2.msra.mxu0 %v75
    %260 = vmatprep.subr.mxu0 0.0
    %261 = vmatpush2.msra.mxu0 %v74
    %262 = vmatprep.subr.mxu0 0.0
    %263 = vmatpush2.msra.mxu0 %v73
    %264 = vmatprep.subr.mxu0 0.0
    %265 = vmatpush2.msra.mxu0 %v72
    %266 = vmatprep.subr.mxu0 0.0
    %267 = vmatpush2.msra.mxu0 %v71
    %268 = vmatprep.subr.mxu0 0.0
    %269 = vmatpush2.msra.mxu0 %v70
    %270 = vmatprep.subr.mxu0 0.0
    %271 = vmatpush2.msra.mxu0 %v69
    %272 = vmatprep.subr.mxu0 0.0
    %273 = vmatpush2.msra.mxu0 %v68
    %274 = vmatprep.subr.mxu0 0.0
    %275 = vmatpush2.msra.mxu0 %v67
    %276 = vmatprep.mubr.f32.mxu0 %v211
    %277 = vmatmul.mubr.f32.gmra.mxu0 %v210
    %v278 = vpop.f32.mrf.mxu0
    %v279 = vadd.f32 0.0, %v278
    %v280 = vpop.f32.mrf.mxu0
    %281 = vdwg.mxu0
    %v282 = vld [vmem:[%s4] sm:$0xff]
    %v283 = vld [vmem:[%s4 + $0x8] sm:$0xff]
    %v284 = vld [vmem:[%s5] sm:$0xff]
    %v285 = vld [vmem:[%s5 + $0x8] sm:$0xff]
    %v286 = vld [vmem:[%s6] sm:$0xff]
    %v287 = vld [vmem:[%s6 + $0x8] sm:$0xff]
    %v288 = vld [vmem:[%s6 + $0x10] sm:$0xff]
    %v289 = vld [vmem:[%s6 + $0x18] sm:$0xff]
    %v290 = vld [vmem:[%s6 + $0x20] sm:$0xff]
    %v291 = vld [vmem:[%s6 + $0x28] sm:$0xff]
    %v292 = vld [vmem:[%s6 + $0x30] sm:$0xff]
    %v293 = vld [vmem:[%s6 + $0x38] sm:$0xff]
    %v294 = vld [vmem:[%s6 + $0x40] sm:$0xff]
    %v295 = vld [vmem:[%s6 + $0x48] sm:$0xff]
    %v296 = vld [vmem:[%s6 + $0x50] sm:$0xff]
    %v297 = vld [vmem:[%s6 + $0x58] sm:$0xff]
    %v298 = vld [vmem:[%s6 + $0x60] sm:$0xff]
    %v299 = vld [vmem:[%s6 + $0x68] sm:$0xff]
    %301 = vrot.lane.b32.xlu0 %v279, 127
    %v302 = vpop.permute.xlu0 %301
    %304 = vrot.lane.b32.xlu0 %v279, 111
    %v305 = vpop.permute.xlu0 %304
    %vm307 = vcmask 908288
    %v308 = vsel %vm307, %v302, %v305
    %309 = vrot.lane.b32.xlu0 %v279, 126
    %v310 = vpop.permute.xlu0 %309
    %312 = vrot.lane.b32.xlu0 %v279, 110
    %v313 = vpop.permute.xlu0 %312
    %vm315 = vcmask 900096
    %v316 = vsel %vm315, %v310, %v313
    %318 = vset.pattern.permute.xlu0 0
    %319 = vperm.xlu0 %318, %v284
    %v320 = vpop.permute.xlu0 %319
    %323 = vset.pattern.permute.xlu0 0
    %324 = vperm.xlu0 %323, %v285
    %v325 = vpop.permute.xlu0 %324
    %vm327 = vcmask 195584
    %v329 = vsel %vm327, %v282, 0
    %v332 = vsel %vm327, %v283, 0
    %334 = vmatprep.subr.mxu0 0.0
    %335 = vmatpush1.msra.mxu0 0.0
    %336 = vmatprep.subr.mxu0 0.0
    %337 = vmatpush1.msra.mxu0 0.0
    %338 = vmatprep.subr.mxu0 0.0
    %339 = vmatpush1.msra.mxu0 0.0
    %340 = vmatprep.subr.mxu0 0.0
    %341 = vmatpush1.msra.mxu0 0.0
    %342 = vmatprep.subr.mxu0 0.0
    %343 = vmatpush1.msra.mxu0 0.0
    %344 = vmatprep.subr.mxu0 0.0
    %345 = vmatpush1.msra.mxu0 0.0
    %346 = vmatprep.subr.mxu0 0.0
    %347 = vmatpush1.msra.mxu0 0.0
    %348 = vmatprep.subr.mxu0 0.0
    %349 = vmatpush1.msra.mxu0 0.0
    %350 = vmatprep.subr.mxu0 0.0
    %351 = vmatpush1.msra.mxu0 0.0
    %352 = vmatprep.subr.mxu0 0.0
    %353 = vmatpush1.msra.mxu0 0.0
    %354 = vmatprep.subr.mxu0 0.0
    %355 = vmatpush1.msra.mxu0 0.0
    %356 = vmatprep.subr.mxu0 0.0
    %357 = vmatpush1.msra.mxu0 0.0
    %358 = vmatprep.subr.mxu0 0.0
    %359 = vmatpush1.msra.mxu0 0.0
    %360 = vmatprep.subr.mxu0 0.0
    %361 = vmatpush1.msra.mxu0 %v316
    %362 = vmatprep.subr.mxu0 0.0
    %363 = vmatpush1.msra.mxu0 %v308
    %364 = vmatprep.subr.mxu0 0.0
    %365 = vmatpush1.msra.mxu0 %v279
    %366 = vmatprep.subr.mxu0 0.0
    %367 = vmatpush2.msra.mxu0 0.0
    %368 = vmatprep.subr.mxu0 0.0
    %369 = vmatpush2.msra.mxu0 0.0
    %370 = vmatprep.subr.mxu0 0.0
    %371 = vmatpush2.msra.mxu0 0.0
    %372 = vmatprep.subr.mxu0 0.0
    %373 = vmatpush2.msra.mxu0 0.0
    %374 = vmatprep.subr.mxu0 0.0
    %375 = vmatpush2.msra.mxu0 0.0
    %376 = vmatprep.subr.mxu0 0.0
    %377 = vmatpush2.msra.mxu0 0.0
    %378 = vmatprep.subr.mxu0 0.0
    %379 = vmatpush2.msra.mxu0 0.0
    %380 = vmatprep.subr.mxu0 0.0
    %381 = vmatpush2.msra.mxu0 0.0
    %382 = vmatprep.subr.mxu0 0.0
    %383 = vmatpush2.msra.mxu0 0.0
    %384 = vmatprep.subr.mxu0 0.0
    %385 = vmatpush2.msra.mxu0 0.0
    %386 = vmatprep.subr.mxu0 0.0
    %387 = vmatpush2.msra.mxu0 0.0
    %388 = vmatprep.subr.mxu0 0.0
    %389 = vmatpush2.msra.mxu0 0.0
    %390 = vmatprep.subr.mxu0 0.0
    %391 = vmatpush2.msra.mxu0 0.0
    %392 = vmatprep.subr.mxu0 0.0
    %393 = vmatpush2.msra.mxu0 0.0
    %394 = vmatprep.subr.mxu0 0.0
    %395 = vmatpush2.msra.mxu0 0.0
    %396 = vmatprep.subr.mxu0 0.0
    %397 = vmatpush2.msra.mxu0 0.0
    %398 = vmatprep.mubr.f32.mxu0 0.0
    %399 = vmatmul.mubr.f32.gmra.mxu0 %v329
    %v400 = vpop.f32.mrf.mxu0
    %v401 = vadd.f32 %v320, %v400
    %v402 = vpop.f32.mrf.mxu0
    %403 = vmatprep.mubr.f32.mxu0 0.0
    %404 = vmatmul.mubr.f32.gmra.mxu0 %v332
    %v405 = vpop.f32.mrf.mxu0
    %v406 = vadd.f32 %v325, %v405
    %v407 = vpop.f32.mrf.mxu0
    %408 = vdwg.mxu0
    %v409 = vmax.f32 %v401, 0.0
    %v410 = vmax.f32 %v406, 0.0
    %413 = vrot.lane.b32.xlu0 %v409, 127
    %v414 = vpop.permute.xlu0 %413
    %415 = vrot.lane.b32.xlu0 %v410, 127
    %v416 = vpop.permute.xlu0 %415
    %419 = vrot.lane.b32.xlu0 %v409, 111
    %v420 = vpop.permute.xlu0 %419
    %421 = vrot.lane.b32.xlu0 %v410, 111
    %v422 = vpop.permute.xlu0 %421
    %v425 = vsel %vm307, %v414, %v420
    %v426 = vsel %vm307, %v416, %v422
    %v427 = vmax.f32 %v409, %v425
    %v428 = vmax.f32 %v410, %v426
    %vm429 = vcmask 916480
    %v431 = vsel %vm429, %v427, 0
    %v434 = vsel %vm429, %v428, 0
    %436 = vmatprep.subr.mxu0 0.0
    %437 = vmatpush1.msra.mxu0 0.0
    %438 = vmatprep.subr.mxu0 0.0
    %439 = vmatpush1.msra.mxu0 0.0
    %440 = vmatprep.subr.mxu0 0.0
    %441 = vmatpush1.msra.mxu0 %v299
    %442 = vmatprep.subr.mxu0 0.0
    %443 = vmatpush1.msra.mxu0 %v298
    %444 = vmatprep.subr.mxu0 0.0
    %445 = vmatpush1.msra.mxu0 %v297
    %446 = vmatprep.subr.mxu0 0.0
    %447 = vmatpush1.msra.mxu0 %v296
    %448 = vmatprep.subr.mxu0 0.0
    %449 = vmatpush1.msra.mxu0 %v295
    %450 = vmatprep.subr.mxu0 0.0
    %451 = vmatpush1.msra.mxu0 %v294
    %452 = vmatprep.subr.mxu0 0.0
    %453 = vmatpush1.msra.mxu0 %v293
    %454 = vmatprep.subr.mxu0 0.0
    %455 = vmatpush1.msra.mxu0 %v292
    %456 = vmatprep.subr.mxu0 0.0
    %457 = vmatpush1.msra.mxu0 %v291
    %458 = vmatprep.subr.mxu0 0.0
    %459 = vmatpush1.msra.mxu0 %v290
    %460 = vmatprep.subr.mxu0 0.0
    %461 = vmatpush1.msra.mxu0 %v289
    %462 = vmatprep.subr.mxu0 0.0
    %463 = vmatpush1.msra.mxu0 %v288
    %464 = vmatprep.subr.mxu0 0.0
    %465 = vmatpush1.msra.mxu0 %v287
    %466 = vmatprep.subr.mxu0 0.0
    %467 = vmatpush1.msra.mxu0 %v286
    %468 = vmatprep.subr.mxu0 0.0
    %469 = vmatpush2.msra.mxu0 0.0
    %470 = vmatprep.subr.mxu0 0.0
    %471 = vmatpush2.msra.mxu0 0.0
    %472 = vmatprep.subr.mxu0 0.0
    %473 = vmatpush2.msra.mxu0 0.0
    %474 = vmatprep.subr.mxu0 0.0
    %475 = vmatpush2.msra.mxu0 0.0
    %476 = vmatprep.subr.mxu0 0.0
    %477 = vmatpush2.msra.mxu0 0.0
    %478 = vmatprep.subr.mxu0 0.0
    %479 = vmatpush2.msra.mxu0 0.0
    %480 = vmatprep.subr.mxu0 0.0
    %481 = vmatpush2.msra.mxu0 0.0
    %482 = vmatprep.subr.mxu0 0.0
    %483 = vmatpush2.msra.mxu0 0.0
    %484 = vmatprep.subr.mxu0 0.0
    %485 = vmatpush2.msra.mxu0 0.0
    %486 = vmatprep.subr.mxu0 0.0
    %487 = vmatpush2.msra.mxu0 0.0
    %488 = vmatprep.subr.mxu0 0.0
    %489 = vmatpush2.msra.mxu0 0.0
    %490 = vmatprep.subr.mxu0 0.0
    %491 = vmatpush2.msra.mxu0 0.0
    %492 = vmatprep.subr.mxu0 0.0
    %493 = vmatpush2.msra.mxu0 0.0
    %494 = vmatprep.subr.mxu0 0.0
    %495 = vmatpush2.msra.mxu0 0.0
    %496 = vmatprep.subr.mxu0 0.0
    %497 = vmatpush2.msra.mxu0 0.0
    %498 = vmatprep.subr.mxu0 0.0
    %499 = vmatpush2.msra.mxu0 0.0
    %500 = vmatprep.mubr.f32.mxu0 0.0
    %501 = vmatmul.mubr.f32.gmra.mxu0 %v431
    %v502 = vpop.f32.mrf.mxu0
    %v503 = vadd.f32 0.0, %v502
    %v504 = vpop.f32.mrf.mxu0
    %505 = vmatprep.mubr.f32.mxu0 0.0
    %506 = vmatmul.mubr.f32.gmra.mxu0 %v434
    %v507 = vpop.f32.mrf.mxu0
    %v508 = vadd.f32 0.0, %v507
    %v509 = vpop.f32.mrf.mxu0
    %510 = vdwg.mxu0
    %v511 = vld [vmem:[%s7] sm:$0xff]
    %v512 = vld [vmem:[%s7 + $0x8] sm:$0xff]
    %v513 = vld [vmem:[%s7 + $0x10] sm:$0xff]
    %v514 = vld [vmem:[%s7 + $0x18] sm:$0xff]
    %v515 = vld [vmem:[%s8] sm:$0xff]
    %v516 = vld [vmem:[%s8 + $0x8] sm:$0xff]
    %v517 = vld [vmem:[%s8 + $0x10] sm:$0xff]
    %v518 = vld [vmem:[%s8 + $0x18] sm:$0xff]
    %v519 = vld [vmem:[%s9] sm:$0xff]
    %v520 = vld [vmem:[%s9 + $0x8] sm:$0xff]
    %v521 = vld [vmem:[%s9 + $0x10] sm:$0xff]
    %v522 = vld [vmem:[%s9 + $0x18] sm:$0xff]
    %v523 = vld [vmem:[%s10] sm:$0xff]
    %v524 = vld [vmem:[%s10 + $0x8] sm:$0xff]
    %v525 = vld [vmem:[%s10 + $0x10] sm:$0xff]
    %v526 = vld [vmem:[%s10 + $0x18] sm:$0xff]
    %v527 = vld [vmem:[%s11] sm:$0xff]
    %v528 = vld [vmem:[%s11 + $0x8] sm:$0xff]
    %v529 = vld [vmem:[%s11 + $0x10] sm:$0xff]
    %v530 = vld [vmem:[%s11 + $0x18] sm:$0xff]
    %vm531 = vcmask 261120
    %v533 = vsel %vm531, %v503, 0
    %v536 = vsel %vm531, %v508, 0
    %538 = vmatprep.subr.mxu0 0.0
    %539 = vmatpush1.msra.mxu0 0.0
    %540 = vmatprep.subr.mxu0 0.0
    %541 = vmatpush1.msra.mxu0 0.0
    %542 = vmatprep.subr.mxu0 0.0
    %543 = vmatpush1.msra.mxu0 0.0
    %544 = vmatprep.subr.mxu0 0.0
    %545 = vmatpush1.msra.mxu0 0.0
    %546 = vmatprep.subr.mxu0 0.0
    %547 = vmatpush1.msra.mxu0 0.0
    %548 = vmatprep.subr.mxu0 0.0
    %549 = vmatpush1.msra.mxu0 0.0
    %550 = vmatprep.subr.mxu0 0.0
    %551 = vmatpush1.msra.mxu0 0.0
    %552 = vmatprep.subr.mxu0 0.0
    %553 = vmatpush1.msra.mxu0 0.0
    %554 = vmatprep.subr.mxu0 0.0
    %555 = vmatpush1.msra.mxu0 0.0
    %556 = vmatprep.subr.mxu0 0.0
    %557 = vmatpush1.msra.mxu0 0.0
    %558 = vmatprep.subr.mxu0 0.0
    %559 = vmatpush1.msra.mxu0 0.0
    %560 = vmatprep.subr.mxu0 0.0
    %561 = vmatpush1.msra.mxu0 0.0
    %562 = vmatprep.subr.mxu0 0.0
    %563 = vmatpush1.msra.mxu0 %v522
    %564 = vmatprep.subr.mxu0 0.0
    %565 = vmatpush1.msra.mxu0 %v521
    %566 = vmatprep.subr.mxu0 0.0
    %567 = vmatpush1.msra.mxu0 %v520
    %568 = vmatprep.subr.mxu0 0.0
    %569 = vmatpush1.msra.mxu0 %v519
    %570 = vmatprep.subr.mxu0 0.0
    %571 = vmatpush2.msra.mxu0 0.0
    %572 = vmatprep.subr.mxu0 0.0
    %573 = vmatpush2.msra.mxu0 0.0
    %574 = vmatprep.subr.mxu0 0.0
    %575 = vmatpush2.msra.mxu0 0.0
    %576 = vmatprep.subr.mxu0 0.0
    %577 = vmatpush2.msra.mxu0 0.0
    %578 = vmatprep.subr.mxu0 0.0
    %579 = vmatpush2.msra.mxu0 0.0
    %580 = vmatprep.subr.mxu0 0.0
    %581 = vmatpush2.msra.mxu0 0.0
    %582 = vmatprep.subr.mxu0 0.0
    %583 = vmatpush2.msra.mxu0 0.0
    %584 = vmatprep.subr.mxu0 0.0
    %585 = vmatpush2.msra.mxu0 0.0
    %586 = vmatprep.subr.mxu0 0.0
    %587 = vmatpush2.msra.mxu0 0.0
    %588 = vmatprep.subr.mxu0 0.0
    %589 = vmatpush2.msra.mxu0 0.0
    %590 = vmatprep.subr.mxu0 0.0
    %591 = vmatpush2.msra.mxu0 0.0
    %592 = vmatprep.subr.mxu0 0.0
    %593 = vmatpush2.msra.mxu0 0.0
    %594 = vmatprep.subr.mxu0 0.0
    %595 = vmatpush2.msra.mxu0 0.0
    %596 = vmatprep.subr.mxu0 0.0
    %597 = vmatpush2.msra.mxu0 0.0
    %598 = vmatprep.subr.mxu0 0.0
    %599 = vmatpush2.msra.mxu0 0.0
    %600 = vmatprep.subr.mxu0 0.0
    %601 = vmatpush2.msra.mxu0 0.0
    %602 = vmatprep.mubr.f32.mxu0 0.0
    %603 = vmatmul.mubr.f32.gmra.mxu0 %v533
    %v604 = vpop.f32.mrf.mxu0
    %v605 = vadd.f32 0.0, %v604
    %v606 = vpop.f32.mrf.mxu0
    %607 = vmatprep.mubr.f32.mxu0 0.0
    %608 = vmatmul.mubr.f32.gmra.mxu0 %v536
    %v609 = vpop.f32.mrf.mxu0
    %v610 = vadd.f32 0.0, %v609
    %v611 = vpop.f32.mrf.mxu0
    %612 = vdwg.mxu0
    %vm613 = vcmask 130048
    %v615 = vsel %vm613, %v511, 0
    %v618 = vsel %vm613, %v512, 0
    %v621 = vsel %vm613, %v513, 0
    %v624 = vsel %vm613, %v514, 0
    %626 = vmatprep.subr.mxu0 0.0
    %627 = vmatpush1.msra.mxu0 0.0
    %628 = vmatprep.subr.mxu0 0.0
    %629 = vmatpush1.msra.mxu0 0.0
    %630 = vmatprep.subr.mxu0 0.0
    %631 = vmatpush1.msra.mxu0 0.0
    %632 = vmatprep.subr.mxu0 0.0
    %633 = vmatpush1.msra.mxu0 0.0
    %634 = vmatprep.subr.mxu0 0.0
    %635 = vmatpush1.msra.mxu0 0.0
    %636 = vmatprep.subr.mxu0 0.0
    %637 = vmatpush1.msra.mxu0 0.0
    %638 = vmatprep.subr.mxu0 0.0
    %639 = vmatpush1.msra.mxu0 0.0
    %640 = vmatprep.subr.mxu0 0.0
    %641 = vmatpush1.msra.mxu0 0.0
    %642 = vmatprep.subr.mxu0 0.0
    %643 = vmatpush1.msra.mxu0 0.0
    %644 = vmatprep.subr.mxu0 0.0
    %645 = vmatpush1.msra.mxu0 0.0
    %646 = vmatprep.subr.mxu0 0.0
    %647 = vmatpush1.msra.mxu0 0.0
    %648 = vmatprep.subr.mxu0 0.0
    %649 = vmatpush1.msra.mxu0 0.0
    %650 = vmatprep.subr.mxu0 0.0
    %651 = vmatpush1.msra.mxu0 0.0
    %652 = vmatprep.subr.mxu0 0.0
    %653 = vmatpush1.msra.mxu0 0.0
    %654 = vmatprep.subr.mxu0 0.0
    %655 = vmatpush1.msra.mxu0 %v610
    %656 = vmatprep.subr.mxu0 0.0
    %657 = vmatpush1.msra.mxu0 %v605
    %658 = vmatprep.subr.mxu0 0.0
    %659 = vmatpush2.msra.mxu0 0.0
    %660 = vmatprep.subr.mxu0 0.0
    %661 = vmatpush2.msra.mxu0 0.0
    %662 = vmatprep.subr.mxu0 0.0
    %663 = vmatpush2.msra.mxu0 0.0
    %664 = vmatprep.subr.mxu0 0.0
    %665 = vmatpush2.msra.mxu0 0.0
    %666 = vmatprep.subr.mxu0 0.0
    %667 = vmatpush2.msra.mxu0 0.0
    %668 = vmatprep.subr.mxu0 0.0
    %669 = vmatpush2.msra.mxu0 0.0
    %670 = vmatprep.subr.mxu0 0.0
    %671 = vmatpush2.msra.mxu0 0.0
    %672 = vmatprep.subr.mxu0 0.0
    %673 = vmatpush2.msra.mxu0 0.0
    %674 = vmatprep.subr.mxu0 0.0
    %675 = vmatpush2.msra.mxu0 0.0
    %676 = vmatprep.subr.mxu0 0.0
    %677 = vmatpush2.msra.mxu0 0.0
    %678 = vmatprep.subr.mxu0 0.0
    %679 = vmatpush2.msra.mxu0 0.0
    %680 = vmatprep.subr.mxu0 0.0
    %681 = vmatpush2.msra.mxu0 0.0
    %682 = vmatprep.subr.mxu0 0.0
    %683 = vmatpush2.msra.mxu0 0.0
    %684 = vmatprep.subr.mxu0 0.0
    %685 = vmatpush2.msra.mxu0 0.0
    %686 = vmatprep.subr.mxu0 0.0
    %687 = vmatpush2.msra.mxu0 0.0
    %688 = vmatprep.subr.mxu0 0.0
    %689 = vmatpush2.msra.mxu0 0.0
    %690 = vmatprep.mubr.f32.mxu0 0.0
    %691 = vmatmul.mubr.f32.gmra.mxu0 %v615
    %v692 = vpop.f32.mrf.mxu0
    %v693 = vadd.f32 0.0, %v692
    %v694 = vpop.f32.mrf.mxu0
    %695 = vmatprep.mubr.f32.mxu0 0.0
    %696 = vmatmul.mubr.f32.gmra.mxu0 %v618
    %v697 = vpop.f32.mrf.mxu0
    %v698 = vadd.f32 0.0, %v697
    %v699 = vpop.f32.mrf.mxu0
    %700 = vmatprep.mubr.f32.mxu0 0.0
    %701 = vmatmul.mubr.f32.gmra.mxu0 %v621
    %v702 = vpop.f32.mrf.mxu0
    %v703 = vadd.f32 0.0, %v702
    %v704 = vpop.f32.mrf.mxu0
    %705 = vmatprep.mubr.f32.mxu0 0.0
    %706 = vmatmul.mubr.f32.gmra.mxu0 %v624
    %v707 = vpop.f32.mrf.mxu0
    %v708 = vadd.f32 0.0, %v707
    %v709 = vpop.f32.mrf.mxu0
    %710 = vdwg.mxu0
    %712 = vset.pattern.permute.xlu0 0
    %713 = vperm.xlu0 %712, %v527
    %v714 = vpop.permute.xlu0 %713
    %717 = vset.pattern.permute.xlu0 0
    %718 = vperm.xlu0 %717, %v528
    %v719 = vpop.permute.xlu0 %718
    %722 = vset.pattern.permute.xlu0 0
    %723 = vperm.xlu0 %722, %v529
    %v724 = vpop.permute.xlu0 %723
    %727 = vset.pattern.permute.xlu0 0
    %728 = vperm.xlu0 %727, %v530
    %v729 = vpop.permute.xlu0 %728
    %v731 = vadd.f32 %v714, %v693
    %v732 = vadd.f32 %v719, %v698
    %v733 = vadd.f32 %v724, %v703
    %v734 = vadd.f32 %v729, %v708
    %735 = vmatprep.subr.mxu0 0.0
    %736 = vmatpush1.msra.mxu0 0.0
    %737 = vmatprep.subr.mxu0 0.0
    %738 = vmatpush1.msra.mxu0 0.0
    %739 = vmatprep.subr.mxu0 0.0
    %740 = vmatpush1.msra.mxu0 0.0
    %741 = vmatprep.subr.mxu0 0.0
    %742 = vmatpush1.msra.mxu0 0.0
    %743 = vmatprep.subr.mxu0 0.0
    %744 = vmatpush1.msra.mxu0 0.0
    %745 = vmatprep.subr.mxu0 0.0
    %746 = vmatpush1.msra.mxu0 0.0
    %747 = vmatprep.subr.mxu0 0.0
    %748 = vmatpush1.msra.mxu0 0.0
    %749 = vmatprep.subr.mxu0 0.0
    %750 = vmatpush1.msra.mxu0 0.0
    %751 = vmatprep.subr.mxu0 0.0
    %752 = vmatpush1.msra.mxu0 0.0
    %753 = vmatprep.subr.mxu0 0.0
    %754 = vmatpush1.msra.mxu0 0.0
    %755 = vmatprep.subr.mxu0 0.0
    %756 = vmatpush1.msra.mxu0 0.0
    %757 = vmatprep.subr.mxu0 0.0
    %758 = vmatpush1.msra.mxu0 0.0
    %759 = vmatprep.subr.mxu0 0.0
    %760 = vmatpush1.msra.mxu0 %v526
    %761 = vmatprep.subr.mxu0 0.0
    %762 = vmatpush1.msra.mxu0 %v525
    %763 = vmatprep.subr.mxu0 0.0
    %764 = vmatpush1.msra.mxu0 %v524
    %765 = vmatprep.subr.mxu0 0.0
    %766 = vmatpush1.msra.mxu0 %v523
    %767 = vmatprep.subr.mxu0 0.0
    %768 = vmatpush2.msra.mxu0 0.0
    %769 = vmatprep.subr.mxu0 0.0
    %770 = vmatpush2.msra.mxu0 0.0
    %771 = vmatprep.subr.mxu0 0.0
    %772 = vmatpush2.msra.mxu0 0.0
    %773 = vmatprep.subr.mxu0 0.0
    %774 = vmatpush2.msra.mxu0 0.0
    %775 = vmatprep.subr.mxu0 0.0
    %776 = vmatpush2.msra.mxu0 0.0
    %777 = vmatprep.subr.mxu0 0.0
    %778 = vmatpush2.msra.mxu0 0.0
    %779 = vmatprep.subr.mxu0 0.0
    %780 = vmatpush2.msra.mxu0 0.0
    %781 = vmatprep.subr.mxu0 0.0
    %782 = vmatpush2.msra.mxu0 0.0
    %783 = vmatprep.subr.mxu0 0.0
    %784 = vmatpush2.msra.mxu0 0.0
    %785 = vmatprep.subr.mxu0 0.0
    %786 = vmatpush2.msra.mxu0 0.0
    %787 = vmatprep.subr.mxu0 0.0
    %788 = vmatpush2.msra.mxu0 0.0
    %789 = vmatprep.subr.mxu0 0.0
    %790 = vmatpush2.msra.mxu0 0.0
    %791 = vmatprep.subr.mxu0 0.0
    %792 = vmatpush2.msra.mxu0 0.0
    %793 = vmatprep.subr.mxu0 0.0
    %794 = vmatpush2.msra.mxu0 0.0
    %795 = vmatprep.subr.mxu0 0.0
    %796 = vmatpush2.msra.mxu0 0.0
    %797 = vmatprep.subr.mxu0 0.0
    %798 = vmatpush2.msra.mxu0 0.0
    %799 = vmatprep.mubr.f32.mxu0 0.0
    %800 = vmatmul.mubr.f32.gmra.mxu0 %v533
    %v801 = vpop.f32.mrf.mxu0
    %v802 = vadd.f32 0.0, %v801
    %v803 = vpop.f32.mrf.mxu0
    %804 = vmatprep.mubr.f32.mxu0 0.0
    %805 = vmatmul.mubr.f32.gmra.mxu0 %v536
    %v806 = vpop.f32.mrf.mxu0
    %v807 = vadd.f32 0.0, %v806
    %v808 = vpop.f32.mrf.mxu0
    %809 = vdwg.mxu0
    %v811 = vsel %vm613, %v515, 0
    %v814 = vsel %vm613, %v516, 0
    %v817 = vsel %vm613, %v517, 0
    %v820 = vsel %vm613, %v518, 0
    %822 = vmatprep.subr.mxu0 0.0
    %823 = vmatpush1.msra.mxu0 0.0
    %824 = vmatprep.subr.mxu0 0.0
    %825 = vmatpush1.msra.mxu0 0.0
    %826 = vmatprep.subr.mxu0 0.0
    %827 = vmatpush1.msra.mxu0 0.0
    %828 = vmatprep.subr.mxu0 0.0
    %829 = vmatpush1.msra.mxu0 0.0
    %830 = vmatprep.subr.mxu0 0.0
    %831 = vmatpush1.msra.mxu0 0.0
    %832 = vmatprep.subr.mxu0 0.0
    %833 = vmatpush1.msra.mxu0 0.0
    %834 = vmatprep.subr.mxu0 0.0
    %835 = vmatpush1.msra.mxu0 0.0
    %836 = vmatprep.subr.mxu0 0.0
    %837 = vmatpush1.msra.mxu0 0.0
    %838 = vmatprep.subr.mxu0 0.0
    %839 = vmatpush1.msra.mxu0 0.0
    %840 = vmatprep.subr.mxu0 0.0
    %841 = vmatpush1.msra.mxu0 0.0
    %842 = vmatprep.subr.mxu0 0.0
    %843 = vmatpush1.msra.mxu0 0.0
    %844 = vmatprep.subr.mxu0 0.0
    %845 = vmatpush1.msra.mxu0 0.0
    %846 = vmatprep.subr.mxu0 0.0
    %847 = vmatpush1.msra.mxu0 0.0
    %848 = vmatprep.subr.mxu0 0.0
    %849 = vmatpush1.msra.mxu0 0.0
    %850 = vmatprep.subr.mxu0 0.0
    %851 = vmatpush1.msra.mxu0 %v807
    %852 = vmatprep.subr.mxu0 0.0
    %853 = vmatpush1.msra.mxu0 %v802
    %854 = vmatprep.subr.mxu0 0.0
    %855 = vmatpush2.msra.mxu0 0.0
    %856 = vmatprep.subr.mxu0 0.0
    %857 = vmatpush2.msra.mxu0 0.0
    %858 = vmatprep.subr.mxu0 0.0
    %859 = vmatpush2.msra.mxu0 0.0
    %860 = vmatprep.subr.mxu0 0.0
    %861 = vmatpush2.msra.mxu0 0.0
    %862 = vmatprep.subr.mxu0 0.0
    %863 = vmatpush2.msra.mxu0 0.0
    %864 = vmatprep.subr.mxu0 0.0
    %865 = vmatpush2.msra.mxu0 0.0
    %866 = vmatprep.subr.mxu0 0.0
    %867 = vmatpush2.msra.mxu0 0.0
    %868 = vmatprep.subr.mxu0 0.0
    %869 = vmatpush2.msra.mxu0 0.0
    %870 = vmatprep.subr.mxu0 0.0
    %871 = vmatpush2.msra.mxu0 0.0
    %872 = vmatprep.subr.mxu0 0.0
    %873 = vmatpush2.msra.mxu0 0.0
    %874 = vmatprep.subr.mxu0 0.0
    %875 = vmatpush2.msra.mxu0 0.0
    %876 = vmatprep.subr.mxu0 0.0
    %877 = vmatpush2.msra.mxu0 0.0
    %878 = vmatprep.subr.mxu0 0.0
    %879 = vmatpush2.msra.mxu0 0.0
    %880 = vmatprep.subr.mxu0 0.0
    %881 = vmatpush2.msra.mxu0 0.0
    %882 = vmatprep.subr.mxu0 0.0
    %883 = vmatpush2.msra.mxu0 0.0
    %884 = vmatprep.subr.mxu0 0.0
    %885 = vmatpush2.msra.mxu0 0.0
    %886 = vmatprep.mubr.f32.mxu0 0.0
    %887 = vmatmul.mubr.f32.gmra.mxu0 %v811
    %v888 = vpop.f32.mrf.mxu0
    %v889 = vadd.f32 0.0, %v888
    %v890 = vpop.f32.mrf.mxu0
    %891 = vmatprep.mubr.f32.mxu0 0.0
    %892 = vmatmul.mubr.f32.gmra.mxu0 %v814
    %v893 = vpop.f32.mrf.mxu0
    %v894 = vadd.f32 0.0, %v893
    %v895 = vpop.f32.mrf.mxu0
    %896 = vmatprep.mubr.f32.mxu0 0.0
    %897 = vmatmul.mubr.f32.gmra.mxu0 %v817
    %v898 = vpop.f32.mrf.mxu0
    %v899 = vadd.f32 0.0, %v898
    %v900 = vpop.f32.mrf.mxu0
    %901 = vmatprep.mubr.f32.mxu0 0.0
    %902 = vmatmul.mubr.f32.gmra.mxu0 %v820
    %v903 = vpop.f32.mrf.mxu0
    %v904 = vadd.f32 0.0, %v903
    %v905 = vpop.f32.mrf.mxu0
    %906 = vdwg.mxu0
    %v907 = vadd.f32 %v731, %v889
    %v908 = vadd.f32 %v732, %v894
    %v909 = vadd.f32 %v733, %v899
    %v910 = vadd.f32 %v734, %v904
    %v911 = vmax.f32 %v907, 0.0
    %v912 = vmax.f32 %v908, 0.0
    %v913 = vmax.f32 %v909, 0.0
    %v914 = vmax.f32 %v910, 0.0
    %v915 = vld [vmem:[%s12] sm:$0x3]
    %v916 = vld [vmem:[%s13] sm:$0x3]
    %918 = vset.pattern.permute.xlu0 0
    %919 = vperm.xlu0 %918, %v916
    %v920 = vpop.permute.xlu0 %919
    %v923 = vsel %vm531, %v915, 0
    %925 = vmatprep.subr.mxu0 0.0
    %926 = vmatpush1.msra.mxu0 0.0
    %927 = vmatprep.subr.mxu0 0.0
    %928 = vmatpush1.msra.mxu0 0.0
    %929 = vmatprep.subr.mxu0 0.0
    %930 = vmatpush1.msra.mxu0 0.0
    %931 = vmatprep.subr.mxu0 0.0
    %932 = vmatpush1.msra.mxu0 0.0
    %933 = vmatprep.subr.mxu0 0.0
    %934 = vmatpush1.msra.mxu0 0.0
    %935 = vmatprep.subr.mxu0 0.0
    %936 = vmatpush1.msra.mxu0 0.0
    %937 = vmatprep.subr.mxu0 0.0
    %938 = vmatpush1.msra.mxu0 0.0
    %939 = vmatprep.subr.mxu0 0.0
    %940 = vmatpush1.msra.mxu0 0.0
    %941 = vmatprep.subr.mxu0 0.0
    %942 = vmatpush1.msra.mxu0 0.0
    %943 = vmatprep.subr.mxu0 0.0
    %944 = vmatpush1.msra.mxu0 0.0
    %945 = vmatprep.subr.mxu0 0.0
    %946 = vmatpush1.msra.mxu0 0.0
    %947 = vmatprep.subr.mxu0 0.0
    %948 = vmatpush1.msra.mxu0 0.0
    %949 = vmatprep.subr.mxu0 0.0
    %950 = vmatpush1.msra.mxu0 %v914
    %951 = vmatprep.subr.mxu0 0.0
    %952 = vmatpush1.msra.mxu0 %v913
    %953 = vmatprep.subr.mxu0 0.0
    %954 = vmatpush1.msra.mxu0 %v912
    %955 = vmatprep.subr.mxu0 0.0
    %956 = vmatpush1.msra.mxu0 %v911
    %957 = vmatprep.subr.mxu0 0.0
    %958 = vmatpush2.msra.mxu0 0.0
    %959 = vmatprep.subr.mxu0 0.0
    %960 = vmatpush2.msra.mxu0 0.0
    %961 = vmatprep.subr.mxu0 0.0
    %962 = vmatpush2.msra.mxu0 0.0
    %963 = vmatprep.subr.mxu0 0.0
    %964 = vmatpush2.msra.mxu0 0.0
    %965 = vmatprep.subr.mxu0 0.0
    %966 = vmatpush2.msra.mxu0 0.0
    %967 = vmatprep.subr.mxu0 0.0
    %968 = vmatpush2.msra.mxu0 0.0
    %969 = vmatprep.subr.mxu0 0.0
    %970 = vmatpush2.msra.mxu0 0.0
    %971 = vmatprep.subr.mxu0 0.0
    %972 = vmatpush2.msra.mxu0 0.0
    %973 = vmatprep.subr.mxu0 0.0
    %974 = vmatpush2.msra.mxu0 0.0
    %975 = vmatprep.subr.mxu0 0.0
    %976 = vmatpush2.msra.mxu0 0.0
    %977 = vmatprep.subr.mxu0 0.0
    %978 = vmatpush2.msra.mxu0 0.0
    %979 = vmatprep.subr.mxu0 0.0
    %980 = vmatpush2.msra.mxu0 0.0
    %981 = vmatprep.subr.mxu0 0.0
    %982 = vmatpush2.msra.mxu0 0.0
    %983 = vmatprep.subr.mxu0 0.0
    %984 = vmatpush2.msra.mxu0 0.0
    %985 = vmatprep.subr.mxu0 0.0
    %986 = vmatpush2.msra.mxu0 0.0
    %987 = vmatprep.subr.mxu0 0.0
    %988 = vmatpush2.msra.mxu0 0.0
    %989 = vmatprep.mubr.f32.mxu0 0.0
    %990 = vmatmul.mubr.f32.gmra.mxu0 %v923
    %v991 = vpop.f32.mrf.mxu0
    %v992 = vadd.f32 %v920, %v991
    %v993 = vpop.f32.mrf.mxu0
    %994 = vdwg.mxu0
    %vm995 = vcmask 123904
    %996 = vst.msk [vmem:[#allocation2] sm:$0x3] %vm995, %v992
    // Predicated region
    $region58: #{tpu_custom_call.1} parent=1 // pred_check
      _
    $region59: #{tpu_custom_call.1} parent=1 // pred_check_branch
      %998 = sbr.rel (0) target = $region61
    $region60: #{tpu_custom_call.1} parent=1 // pred_region
      %s1000 = ssub.s32 32, 32
      %1001 = vsyncadd [#allocation3], %s1000
      %s1003 = sshll.u32 [#allocation2], 4
      %s1004 = int_to_ptr.vmem [resolvable:$true] %s1003
      %1006 = dma.vmem_to_hbm [thread:$0]  %s1004, 32, %s14, [#allocation3]
    $region61: #{tpu_custom_call.1} parent=1 // pred_fallthru
      _
    // Predicated region
    $region62: #{tpu_custom_call.1} parent=1 // pred_check
      _
    $region63: #{tpu_custom_call.1} parent=1 // pred_check_branch
      %1008 = sbr.rel (0) target = $region65
    $region64: #{tpu_custom_call.1} parent=1 // pred_region
      %1009 = dma.done [#allocation3], 32
    $region65: #{tpu_custom_call.1} parent=1 // pred_fallthru
      _
    %1010 = vsyncpa [#allocation3], 1

</llo_original>
